<compile_context>
chip_gen: v7x
topology: tpu7x:2x2x1
jax: 0.10.0
libtpu: 0.0.40
codegen_flags: <defaults>
</compile_context>

<pallas_src>
import jax
import jax.numpy as jnp
from jax import lax
from jax.experimental import pallas as pl
from jax.experimental.pallas import tpu as pltpu

_LANE = 128
_MAX_BLOCK_ROWS = 2048  # 2048*128*4B = 1 MiB per input block


def _make_kernel(rows, block_rows, bps, needs_mask):
    def kernel(o_ref, m_ref, out_ref, acc_o, acc_m, acc_i):
        s = pl.program_id(0)  # core split ("parallel")
        j = pl.program_id(1)  # reduction step ("arbitrary")

        @pl.when(j == 0)
        def _():
            acc_o[...] = jnp.zeros_like(acc_o)
            acc_m[...] = jnp.zeros_like(acc_m)
            acc_i[...] = jnp.zeros_like(acc_i)

        o = o_ref[...].astype(jnp.float32)
        m = m_ref[...].astype(jnp.float32)

        if needs_mask:
            # Zero rows past the true extent (partial last block and any
            # phantom blocks created by the core split).
            blk = s * bps + j
            valid = rows - blk * block_rows
            keep = lax.broadcasted_iota(jnp.int32, (block_rows, _LANE), 0) < valid
            o = jnp.where(keep, o, 0.0)
            m = jnp.where(keep, m, 0.0)

        inter = o * m

        def fold(x):  # (block_rows, 128) -> (8, 128): pure vreg adds
            return jnp.sum(x.reshape(block_rows // 8, 8, _LANE), axis=0)

        acc_o[...] += fold(o)
        acc_m[...] += fold(m)
        acc_i[...] += fold(inter)

        @pl.when(j == pl.num_programs(1) - 1)
        def _():
            out_ref[0, 0] = acc_o[...]
            out_ref[0, 1] = acc_m[...]
            out_ref[0, 2] = acc_i[...]

    return kernel


def iou_loss_2d(output_2d, mask_2d):
    """loss1 of IouLoss2D_DICELoss3D.forward (scalar float32)."""
    assert output_2d.shape == mask_2d.shape
    eps = jnp.float32(1e-8)

    o = output_2d.reshape(-1)
    m = mask_2d.reshape(-1)
    n = o.shape[0]

    # Lane alignment: free reshape when n % 128 == 0 (common case); otherwise
    # pad the <128-element remainder (one copy, rare).
    pad = (-n) % _LANE
    if pad:
        o = jnp.pad(o, (0, pad))
        m = jnp.pad(m, (0, pad))
    rows = (n + pad) // _LANE
    o2 = o.reshape(rows, _LANE)
    m2 = m.reshape(rows, _LANE)

    # Block sizing: ~1 MiB per input per block, rows a multiple of 8 sublanes.
    if rows >= _MAX_BLOCK_ROWS:
        block_rows = _MAX_BLOCK_ROWS
    elif rows >= 8:
        block_rows = (rows // 8) * 8
    else:
        block_rows = 8  # tiny input: single partial block, tail rows masked

    total_blocks = pl.cdiv(rows, block_rows)
    nsplit = 2 if total_blocks >= 2 else 1  # v7x: 2 TCs; harmless on v5e/v6e
    bps = pl.cdiv(total_blocks, nsplit)
    needs_mask = (rows % block_rows != 0) or (nsplit * bps != total_blocks)

    if nsplit * bps == total_blocks:
        def in_map(s, j):
            return (s * bps + j, 0)
    else:
        # Clamp phantom block indices (their contribution is masked to zero).
        def in_map(s, j):
            return (jnp.minimum(s * bps + j, total_blocks - 1), 0)

    partials = pl.pallas_call(
        _make_kernel(rows, block_rows, bps, needs_mask),
        out_shape=jax.ShapeDtypeStruct((nsplit, 3, 8, _LANE), jnp.float32),
        grid_spec=pltpu.PrefetchScalarGridSpec(
            num_scalar_prefetch=0,
            grid=(nsplit, bps),
            in_specs=[
                pl.BlockSpec((block_rows, _LANE), in_map),
                pl.BlockSpec((block_rows, _LANE), in_map),
            ],
            out_specs=pl.BlockSpec((1, 3, 8, _LANE), lambda s, j: (s, 0, 0, 0)),
            scratch_shapes=[pltpu.VMEM((8, _LANE), jnp.float32)] * 3,
        ),
        compiler_params=pltpu.CompilerParams(
            dimension_semantics=("parallel", "arbitrary"),
        ),
    )(o2, m2)

    # Tiny epilogue in plain JAX: (nsplit, 3, 8, 128) -> 3 scalars -> loss.
    sums = jnp.sum(partials, axis=(0, 2, 3))  # [sum_o, sum_m, sum_inter]
    sum_o, sum_m, inter = sums[0], sums[1], sums[2]
    union = sum_o + sum_m - inter
    return jnp.float32(1.0) - (inter + eps) / (union + eps)


def iou_loss_2d_dice_loss_3d_forward(output_2d, mask_2d, index_weight=None,
                                     randomint=None, a=1.0, b=1.0):
    loss1 = iou_loss_2d(output_2d, mask_2d)
    # TODO(synk): loss2 (DICE-3D via rebuild_3d / spiral_config) is not
    # translatable from the given spec; returning the IoU branch only.
    return loss1


def _iou_loss_ref(output, mask):
    inter = output * mask
    intersection = jnp.sum(inter)
    union = jnp.sum(output + mask - inter)
    eps = 1e-8
    return 1.0 - (intersection + eps) / (union + eps)


if __name__ == "__main__":
    key = jax.random.PRNGKey(0)
    k1, k2 = jax.random.split(key)
    # NCHW segmentation output/mask pair: 2*4*16*16 = 2048 elements (16 lane-rows)
    shape = (2, 4, 16, 16)
    output_2d = jax.nn.sigmoid(jax.random.normal(k1, shape, dtype=jnp.float32))
    mask_2d = (jax.random.uniform(k2, shape) > 0.5).astype(jnp.float32)

    loss1 = jax.block_until_ready(iou_loss_2d(output_2d, mask_2d))
    ref = jax.block_until_ready(_iou_loss_ref(output_2d, mask_2d))

    assert jnp.allclose(loss1, ref, rtol=1e-5, atol=1e-6), (loss1, ref)
    print("KERNEL_OK")
</pallas_src>

<mosaic_0001>
module attributes {stable_mosaic.version = 11 : i64} {
  func.func @kernel(%arg0: i32, %arg1: i32, %arg2: memref<16x128xf32, #tpu.memory_space<vmem>>, %arg3: memref<16x128xf32, #tpu.memory_space<vmem>>, %arg4: memref<1x3x8x128xf32, #tpu.memory_space<vmem>>, %arg5: memref<8x128xf32, #tpu.memory_space<vmem>>, %arg6: memref<8x128xf32, #tpu.memory_space<vmem>>, %arg7: memref<8x128xf32, #tpu.memory_space<vmem>>) attributes {dimension_semantics = [#tpu.dimension_semantics<parallel>, #tpu.dimension_semantics<arbitrary>], iteration_bounds = array<i64: 1, 1>, scalar_prefetch = 0 : i64, scratch_operands = 3 : i64, tpu.core_type = #tpu.core_type<tc>, window_params = [{transform_indices = @transform_0, window_bounds = array<i64: 16, 128>}, {transform_indices = @transform_1, window_bounds = array<i64: 16, 128>}, {transform_indices = @transform_2, window_bounds = array<i64: 1, 3, 8, 128>}]} {
    %c0_i32 = arith.constant 0 : i32
    %0 = arith.cmpi eq, %arg1, %c0_i32 : i32
    %1 = arith.extui %0 : i1 to i32
    %c0_i32_0 = arith.constant 0 : i32
    %2 = arith.cmpi ne, %1, %c0_i32_0 : i32
    scf.if %2 {
      %cst_20 = arith.constant 0.000000e+00 : f32
      %24 = vector.broadcast %cst_20 : f32 to vector<8x128xf32>
      %c0_21 = arith.constant 0 : index
      %c0_22 = arith.constant 0 : index
      %25 = vector.load %arg5[%c0_21, %c0_22] : memref<8x128xf32, #tpu.memory_space<vmem>>, vector<8x128xf32>
      tpu.vector_store %arg5[%c0_21, %c0_22], %24 {strides = array<i32>} : memref<8x128xf32, #tpu.memory_space<vmem>>, vector<8x128xf32>,
      %cst_23 = arith.constant 0.000000e+00 : f32
      %26 = vector.broadcast %cst_23 : f32 to vector<8x128xf32>
      %c0_24 = arith.constant 0 : index
      %c0_25 = arith.constant 0 : index
      %27 = vector.load %arg6[%c0_24, %c0_25] : memref<8x128xf32, #tpu.memory_space<vmem>>, vector<8x128xf32>
      tpu.vector_store %arg6[%c0_24, %c0_25], %26 {strides = array<i32>} : memref<8x128xf32, #tpu.memory_space<vmem>>, vector<8x128xf32>,
      %cst_26 = arith.constant 0.000000e+00 : f32
      %28 = vector.broadcast %cst_26 : f32 to vector<8x128xf32>
      %c0_27 = arith.constant 0 : index
      %c0_28 = arith.constant 0 : index
      %29 = vector.load %arg7[%c0_27, %c0_28] : memref<8x128xf32, #tpu.memory_space<vmem>>, vector<8x128xf32>
      tpu.vector_store %arg7[%c0_27, %c0_28], %28 {strides = array<i32>} : memref<8x128xf32, #tpu.memory_space<vmem>>, vector<8x128xf32>,
    } else {
    }
    %c0 = arith.constant 0 : index
    %c0_1 = arith.constant 0 : index
    %3 = vector.load %arg2[%c0, %c0_1] : memref<16x128xf32, #tpu.memory_space<vmem>>, vector<16x128xf32>
    %c0_2 = arith.constant 0 : index
    %c0_3 = arith.constant 0 : index
    %4 = vector.load %arg3[%c0_2, %c0_3] : memref<16x128xf32, #tpu.memory_space<vmem>>, vector<16x128xf32>
    %5 = arith.mulf %3, %4 : vector<16x128xf32>
    %c0_4 = arith.constant 0 : index
    %c0_5 = arith.constant 0 : index
    %6 = vector.load %arg5[%c0_4, %c0_5] : memref<8x128xf32, #tpu.memory_space<vmem>>, vector<8x128xf32>
    %7 = vector.shape_cast %3 : vector<16x128xf32> to vector<2x8x128xf32>
    %cst = arith.constant dense<0.000000e+00> : vector<8x128xf32>
    %8 = vector.multi_reduction <add>, %7, %cst [0] : vector<2x8x128xf32> to vector<8x128xf32>
    %9 = arith.addf %6, %8 : vector<8x128xf32>
    %c0_6 = arith.constant 0 : index
    %c0_7 = arith.constant 0 : index
    %10 = vector.load %arg5[%c0_6, %c0_7] : memref<8x128xf32, #tpu.memory_space<vmem>>, vector<8x128xf32>
    tpu.vector_store %arg5[%c0_6, %c0_7], %9 {strides = array<i32>} : memref<8x128xf32, #tpu.memory_space<vmem>>, vector<8x128xf32>,
    %c0_8 = arith.constant 0 : index
    %c0_9 = arith.constant 0 : index
    %11 = vector.load %arg6[%c0_8, %c0_9] : memref<8x128xf32, #tpu.memory_space<vmem>>, vector<8x128xf32>
    %12 = vector.shape_cast %4 : vector<16x128xf32> to vector<2x8x128xf32>
    %cst_10 = arith.constant dense<0.000000e+00> : vector<8x128xf32>
    %13 = vector.multi_reduction <add>, %12, %cst_10 [0] : vector<2x8x128xf32> to vector<8x128xf32>
    %14 = arith.addf %11, %13 : vector<8x128xf32>
    %c0_11 = arith.constant 0 : index
    %c0_12 = arith.constant 0 : index
    %15 = vector.load %arg6[%c0_11, %c0_12] : memref<8x128xf32, #tpu.memory_space<vmem>>, vector<8x128xf32>
    tpu.vector_store %arg6[%c0_11, %c0_12], %14 {strides = array<i32>} : memref<8x128xf32, #tpu.memory_space<vmem>>, vector<8x128xf32>,
    %c0_13 = arith.constant 0 : index
    %c0_14 = arith.constant 0 : index
    %16 = vector.load %arg7[%c0_13, %c0_14] : memref<8x128xf32, #tpu.memory_space<vmem>>, vector<8x128xf32>
    %17 = vector.shape_cast %5 : vector<16x128xf32> to vector<2x8x128xf32>
    %cst_15 = arith.constant dense<0.000000e+00> : vector<8x128xf32>
    %18 = vector.multi_reduction <add>, %17, %cst_15 [0] : vector<2x8x128xf32> to vector<8x128xf32>
    %19 = arith.addf %16, %18 : vector<8x128xf32>
    %c0_16 = arith.constant 0 : index
    %c0_17 = arith.constant 0 : index
    %20 = vector.load %arg7[%c0_16, %c0_17] : memref<8x128xf32, #tpu.memory_space<vmem>>, vector<8x128xf32>
    tpu.vector_store %arg7[%c0_16, %c0_17], %19 {strides = array<i32>} : memref<8x128xf32, #tpu.memory_space<vmem>>, vector<8x128xf32>,
    %c0_i32_18 = arith.constant 0 : i32
    %21 = arith.cmpi eq, %arg1, %c0_i32_18 : i32
    %22 = arith.extui %21 : i1 to i32
    %c0_i32_19 = arith.constant 0 : i32
    %23 = arith.cmpi ne, %22, %c0_i32_19 : i32
    scf.if %23 {
      %c0_20 = arith.constant 0 : index
      %c0_21 = arith.constant 0 : index
      %24 = vector.load %arg5[%c0_20, %c0_21] : memref<8x128xf32, #tpu.memory_space<vmem>>, vector<8x128xf32>
      %c0_22 = arith.constant 0 : index
      %c0_23 = arith.constant 0 : index
      %c0_24 = arith.constant 0 : index
      %c0_25 = arith.constant 0 : index
      %25 = vector.load %arg4[%c0_22, %c0_23, %c0_24, %c0_25] : memref<1x3x8x128xf32, #tpu.memory_space<vmem>>, vector<1x1x8x128xf32>
      %26 = vector.shape_cast %25 : vector<1x1x8x128xf32> to vector<8x128xf32>
      %27 = vector.shape_cast %24 : vector<8x128xf32> to vector<1x1x8x128xf32>
      tpu.vector_store %arg4[%c0_22, %c0_23, %c0_24, %c0_25], %27 {strides = array<i32>} : memref<1x3x8x128xf32, #tpu.memory_space<vmem>>, vector<1x1x8x128xf32>,
      %c0_26 = arith.constant 0 : index
      %c0_27 = arith.constant 0 : index
      %28 = vector.load %arg6[%c0_26, %c0_27] : memref<8x128xf32, #tpu.memory_space<vmem>>, vector<8x128xf32>
      %c0_28 = arith.constant 0 : index
      %c1 = arith.constant 1 : index
      %c0_29 = arith.constant 0 : index
      %c0_30 = arith.constant 0 : index
      %29 = vector.load %arg4[%c0_28, %c1, %c0_29, %c0_30] : memref<1x3x8x128xf32, #tpu.memory_space<vmem>>, vector<1x1x8x128xf32>
      %30 = vector.shape_cast %29 : vector<1x1x8x128xf32> to vector<8x128xf32>
      %31 = vector.shape_cast %28 : vector<8x128xf32> to vector<1x1x8x128xf32>
      tpu.vector_store %arg4[%c0_28, %c1, %c0_29, %c0_30], %31 {strides = array<i32>} : memref<1x3x8x128xf32, #tpu.memory_space<vmem>>, vector<1x1x8x128xf32>,
      %c0_31 = arith.constant 0 : index
      %c0_32 = arith.constant 0 : index
      %32 = vector.load %arg7[%c0_31, %c0_32] : memref<8x128xf32, #tpu.memory_space<vmem>>, vector<8x128xf32>
      %c0_33 = arith.constant 0 : index
      %c2 = arith.constant 2 : index
      %c0_34 = arith.constant 0 : index
      %c0_35 = arith.constant 0 : index
      %33 = vector.load %arg4[%c0_33, %c2, %c0_34, %c0_35] : memref<1x3x8x128xf32, #tpu.memory_space<vmem>>, vector<1x1x8x128xf32>
      %34 = vector.shape_cast %33 : vector<1x1x8x128xf32> to vector<8x128xf32>
      %35 = vector.shape_cast %32 : vector<8x128xf32> to vector<1x1x8x128xf32>
      tpu.vector_store %arg4[%c0_33, %c2, %c0_34, %c0_35], %35 {strides = array<i32>} : memref<1x3x8x128xf32, #tpu.memory_space<vmem>>, vector<1x1x8x128xf32>,
    } else {
    }
    return
  }
  func.func @transform_0(%arg0: i32, %arg1: i32) -> (i32, i32) {
    %c1_i32 = arith.constant 1 : i32
    %0 = arith.muli %arg0, %c1_i32 : i32
    %1 = arith.addi %0, %arg1 : i32
    %c0_i32 = arith.constant 0 : i32
    %c0_i32_0 = arith.constant 0 : i32
    return %1, %c0_i32 : i32, i32
  }
  func.func @transform_1(%arg0: i32, %arg1: i32) -> (i32, i32) {
    %c1_i32 = arith.constant 1 : i32
    %0 = arith.muli %arg0, %c1_i32 : i32
    %1 = arith.addi %0, %arg1 : i32
    %c0_i32 = arith.constant 0 : i32
    %c0_i32_0 = arith.constant 0 : i32
    return %1, %c0_i32 : i32, i32
  }
  func.func @transform_2(%arg0: i32, %arg1: i32) -> (i32, i32, i32, i32) {
    %c0_i32 = arith.constant 0 : i32
    %c0_i32_0 = arith.constant 0 : i32
    %c0_i32_1 = arith.constant 0 : i32
    %c0_i32_2 = arith.constant 0 : i32
    return %arg0, %c0_i32, %c0_i32_0, %c0_i32_1 : i32, i32, i32, i32
  }
}

</mosaic_0001>

<llo_original>
// kernel: tpu_custom_call.1
$region0: #{tpu_custom_call.1}
  #allocation0 [shape = 'u32[]', space=smem, size = 0x4, offset = 0x4, fixed_abs, tag = 'smem constant byte address 0x4 - core index']
  #allocation1 [shape = 'u32[144,128]{1,0:T(1,128)}', space=vmem, size = 0x12000, scoped, tag = 'internal scratch']
  #allocation2 [shape = 'f32[8,128]{1,0:T(8,128)}', space=vmem, size = 0x1000, scoped, tag = 'scratch operand']
  #allocation3 [shape = 'f32[8,128]{1,0:T(8,128)}', space=vmem, size = 0x1000, scoped, tag = 'scratch operand']
  #allocation4 [shape = 'f32[8,128]{1,0:T(8,128)}', space=vmem, size = 0x1000, scoped, tag = 'scratch operand']
  %s0 = inlined_call_operand.hbm [shape: f32[16,128], index: 0, kind: input, shape index: {}]
  %s1 = inlined_call_operand.hbm [shape: f32[16,128], index: 1, kind: input, shape index: {}]
  %s2 = inlined_call_operand.hbm [shape: f32[1,3,8,128], index: 2, kind: output, shape index: {}]
  %s3 = sld [smem:[#allocation0]]
  $region34: #{tpu_custom_call.1} parent=0
    _
  %s5 = ssub.s32 1, %s3
  %s6 = scalar_select 0, %s5, %s3
  $region1: #{tpu_custom_call.1} parent=0
    #allocation5 [shape = 'u8[8192]{0}', space=vmem, size = 0x2000, scoped, tag = 'input window, operand 0, single buffered']
    #allocation6 [shape = 's32[1]{0}', space=sflag, size = 0x4, scoped, tag = 'scoped memory for tpu_custom_call.1']
    #allocation7 [shape = 's32[1]{0}', space=sflag, size = 0x4, scoped, tag = 'scoped memory for tpu_custom_call.1']
    #allocation8 [shape = 'u8[8192]{0}', space=vmem, size = 0x2000, scoped, tag = 'input window, operand 1, single buffered']
    #allocation9 [shape = 's32[1]{0}', space=sflag, size = 0x4, scoped, tag = 'scoped memory for tpu_custom_call.1']
    #allocation10 [shape = 'u8[12288]{0}', space=vmem, size = 0x3000, scoped, tag = 'output window, operand 0, single buffered']
    %7 = vsyncpa [#allocation6], 0
    %8 = vsyncpa [#allocation9], 0
    %9 = vsyncpa [#allocation7], 0
    // Predicated region
    $region2: #{tpu_custom_call.1} parent=1 // pred_check
      _
    $region3: #{tpu_custom_call.1} parent=1 // pred_check_branch
      %11 = sbr.rel (0) target = $region5
    $region4: #{tpu_custom_call.1} parent=1 // pred_region
      %s12 = sadd.s32 0, 0
      %s13 = smul.u32 2, %s12
      %s15 = ssub.s32 256, 256
      %16 = vsyncadd [#allocation6], %s15
      %s17 = smul.addr %s13, 128
      %s18 = scalar_lea.hbm %s0, %s17
      %s19 = sshll.u32 [#allocation5], 4
      %s20 = int_to_ptr.vmem [resolvable:$true] %s19
      %25 = dma.hbm_to_vmem [thread:$0]  %s18, 256, %s20, [#allocation6], 128, 128, 8
    $region5: #{tpu_custom_call.1} parent=1 // pred_fallthru
      _
    // Predicated region
    $region6: #{tpu_custom_call.1} parent=1 // pred_check
      _
    $region7: #{tpu_custom_call.1} parent=1 // pred_check_branch
      %27 = sbr.rel (0) target = $region9
    $region8: #{tpu_custom_call.1} parent=1 // pred_region
      %s28 = sadd.s32 0, 0
      %s29 = smul.u32 2, %s28
      %s31 = ssub.s32 256, 256
      %32 = vsyncadd [#allocation9], %s31
      %s33 = smul.addr %s29, 128
      %s34 = scalar_lea.hbm %s1, %s33
      %s35 = sshll.u32 [#allocation8], 4
      %s36 = int_to_ptr.vmem [resolvable:$true] %s35
      %41 = dma.hbm_to_vmem [thread:$0]  %s34, 256, %s36, [#allocation9], 128, 128, 8
    $region9: #{tpu_custom_call.1} parent=1 // pred_fallthru
      _
    // Predicated region
    $region10: #{tpu_custom_call.1} parent=1 // pred_check
      _
    $region11: #{tpu_custom_call.1} parent=1 // pred_check_branch
      %43 = sbr.rel (0) target = $region13
    $region12: #{tpu_custom_call.1} parent=1 // pred_region
      %44 = dma.done [#allocation6], 256
    $region13: #{tpu_custom_call.1} parent=1 // pred_fallthru
      _
    // Predicated region
    $region14: #{tpu_custom_call.1} parent=1 // pred_check
      _
    $region15: #{tpu_custom_call.1} parent=1 // pred_check_branch
      %46 = sbr.rel (0) target = $region17
    $region16: #{tpu_custom_call.1} parent=1 // pred_region
      %47 = dma.done [#allocation9], 256
    $region17: #{tpu_custom_call.1} parent=1 // pred_fallthru
      _
    %s48 = sadd.s32 0, 0
    %s49 = smul.u32 2, %s48
    %s50 = sadd.s32 0, 0
    %s51 = smul.u32 2, %s50
    %p52 = scmp.eq.s32.totalorder 0, 0
    // Predicated region
    $region18: #{tpu_custom_call.1} parent=1 // pred_check
      %p53 = pneg %p52
    $region19: #{tpu_custom_call.1} parent=1 // pred_check_branch
      %55 = sbr.rel (%p53) target = $region21
    $region20: #{tpu_custom_call.1} parent=1 // pred_region
      %56 = vst [vmem:[#allocation2] sm:$0xff] 0.0
      %57 = vst [vmem:[#allocation3] sm:$0xff] 0.0
      %58 = vst [vmem:[#allocation4] sm:$0xff] 0.0
    $region21: #{tpu_custom_call.1} parent=1 // pred_fallthru
      _
    %v59 = vld [vmem:[#allocation5] sm:$0xff]
    %v60 = vld [vmem:[#allocation5 + $0x8] sm:$0xff]
    %v61 = vld [vmem:[#allocation8] sm:$0xff]
    %v62 = vld [vmem:[#allocation8 + $0x8] sm:$0xff]
    %v63 = vmul.f32 %v59, %v61
    %v64 = vmul.f32 %v60, %v62
    %v65 = vld [vmem:[#allocation2] sm:$0xff]
    %v66 = vadd.f32 %v59, %v60
    %v67 = vadd.f32 %v65, %v66
    %68 = vst [vmem:[#allocation2] sm:$0xff] %v67
    %v69 = vld [vmem:[#allocation3] sm:$0xff]
    %v70 = vadd.f32 %v61, %v62
    %v71 = vadd.f32 %v69, %v70
    %72 = vst [vmem:[#allocation3] sm:$0xff] %v71
    %v73 = vld [vmem:[#allocation4] sm:$0xff]
    %v74 = vadd.f32 %v63, %v64
    %v75 = vadd.f32 %v73, %v74
    %76 = vst [vmem:[#allocation4] sm:$0xff] %v75
    // Predicated region
    $region22: #{tpu_custom_call.1} parent=1 // pred_check
      %p77 = pneg %p52
    $region23: #{tpu_custom_call.1} parent=1 // pred_check_branch
      %79 = sbr.rel (%p77) target = $region25
    $region24: #{tpu_custom_call.1} parent=1 // pred_region
      %v80 = vld [vmem:[#allocation2] sm:$0xff]
      %81 = vst [vmem:[#allocation10] sm:$0xff] %v80
      %v82 = vld [vmem:[#allocation3] sm:$0xff]
      %s83 = scalar_lea.vmem [#allocation10], 8
      %84 = vst [vmem:[%s83] sm:$0xff] %v82
      %v85 = vld [vmem:[#allocation4] sm:$0xff]
      %s86 = scalar_lea.vmem [#allocation10], 16
      %87 = vst [vmem:[%s86] sm:$0xff] %v85
    $region25: #{tpu_custom_call.1} parent=1 // pred_fallthru
      _
    // Predicated region
    $region26: #{tpu_custom_call.1} parent=1 // pred_check
      _
    $region27: #{tpu_custom_call.1} parent=1 // pred_check_branch
      %89 = sbr.rel (0) target = $region29
    $region28: #{tpu_custom_call.1} parent=1 // pred_region
      %s91 = ssub.s32 384, 384
      %92 = vsyncadd [#allocation7], %s91
      %s93 = sshll.u32 [#allocation10], 4
      %s94 = int_to_ptr.vmem [resolvable:$true] %s93
      %99 = dma.vmem_to_hbm [thread:$0]  %s94, 384, %s2, [#allocation7], 128, 128, 8
    $region29: #{tpu_custom_call.1} parent=1 // pred_fallthru
      _
    // Predicated region
    $region30: #{tpu_custom_call.1} parent=1 // pred_check
      _
    $region31: #{tpu_custom_call.1} parent=1 // pred_check_branch
      %101 = sbr.rel (0) target = $region33
    $region32: #{tpu_custom_call.1} parent=1 // pred_region
      %102 = dma.done [#allocation7], 384
    $region33: #{tpu_custom_call.1} parent=1 // pred_fallthru
      _
    %103 = vsyncpa [#allocation6], 1
    %104 = vsyncpa [#allocation9], 1
    %105 = vsyncpa [#allocation7], 1

</llo_original>
